<compile_context>
chip_gen: v5e
topology: v5e:2x2
jax: 0.10.0
libtpu: 0.0.40
codegen_flags: <defaults>
</compile_context>

<pallas_src>
import functools

import jax
import jax.numpy as jnp
from jax.experimental import pallas as pl
from jax.experimental.pallas import tpu as pltpu


def doubleres_kernel(x_ref, w1c_ref, bcat_ref, w2c_ref, b2_ref, mask_ref,
                     out_ref, h1pad_ref, *, Wp, M, Cout):
    """One image per grid step.

    x_ref:      (1, Cin, Px)     zero-padded, spatially flattened image; Px = M + 2*(Wp+1)
    w1c_ref:    (2*Cout, 9*Cin)  conv1 (BN1 folded) stacked per tap; rows [Cout:] hold the
                                 downsample 1x1 (BN_d folded) in the centre-tap block
    bcat_ref:   (2*Cout, 1)      [b1; bd]  (f32)
    w2c_ref:    (Cout, 9*Cout)   conv2 (BN2 folded) stacked per tap
    b2_ref:     (Cout, 1)        (f32)
    mask_ref:   (1, M)           1.0 where column m (= h*Wp + w) is a real pixel (w < W)
    out_ref:    (1, Cout, M)     lane-dense output on the m = h*Wp + w grid
    h1pad_ref:  (Cout, Px)       VMEM scratch: conv1 output on the zero-padded grid (f32)
    """
    f32 = jnp.float32
    center = Wp + 1                      # padded-grid offset of output pixel (h, w)
    offs = tuple(dy * Wp + dx for dy in range(3) for dx in range(3))
    mm_dtype = w1c_ref.dtype             # matmul operand dtype (f32 or bf16)

    mask = mask_ref[...]                 # (1, M) f32

    # ---- conv1 (3x3, pad=1) + downsample 1x1, ONE stacked matmul --------------------
    # Read the whole padded image once; the 9 shifted views are static slices of the
    # value (lane shifts go through the XLU, no repeated masked vlds).
    xf = x_ref[0].astype(f32)                                        # (Cin, Px)
    im1 = jnp.concatenate([xf[:, o:o + M] for o in offs], axis=0)    # (9*Cin, M) f32
    z = jnp.dot(w1c_ref[...], im1.astype(mm_dtype),
                preferred_element_type=f32) + bcat_ref[...]          # (2*Cout, M) f32

    # conv1 -> BN1 -> ReLU; zero the wrapped (invalid) columns so they act as conv2's
    # zero padding (required before writing into h1pad).
    h1 = jnp.maximum(z[:Cout], 0.0) * mask                           # (Cout, M)
    residual = z[Cout:]                                              # (Cout, M)

    # ---- rebuild conv1 output on the zero-padded grid --------------------------------
    # The live window is fully overwritten every step; only the border columns need to
    # be (re)zeroed.  No program_id guard -> safe under megacore parallel grids.
    h1pad_ref[:, pl.ds(center, M)] = h1
    h1pad_ref[:, pl.ds(0, center)] = jnp.zeros((Cout, center), f32)
    h1pad_ref[:, pl.ds(center + M, center)] = jnp.zeros((Cout, center), f32)

    # ---- conv2 (3x3, pad=1), ONE stacked matmul ---------------------------------------
    hp = h1pad_ref[...]                                              # (Cout, Px) f32
    im2 = jnp.concatenate([hp[:, o:o + M] for o in offs], axis=0)    # (9*Cout, M) f32
    y = jnp.dot(w2c_ref[...], im2.astype(mm_dtype),
                preferred_element_type=f32) + b2_ref[...]            # (Cout, M) f32

    # ---- residual add + ReLU ----------------------------------------------------------
    out_ref[0] = jnp.maximum(y + residual, 0.0).astype(out_ref.dtype)


def doubleres_forward(x_nchw, folded_params, *, param_dtype=jnp.float32):
    """Fused Doubleres forward. Returns NCHW output (f32)."""
    w1c, bcat, w2c, b2 = folded_params
    N, Cin, H, W = x_nchw.shape
    Cout = w2c.shape[0]
    Hp, Wp = H + 2, W + 2
    center = Wp + 1
    M = H * Wp                       # lane-dense output length; m = h*Wp + w
    Px = M + 2 * center              # flattened padded-x columns (covers every tap window)

    # zero-pad spatially, flatten (Hp, Wp) onto the lane axis, pad to Px columns.
    # TODO(synk): for large shapes do this padding with in-kernel DMA instead of jnp.pad
    # (the host-side pad is an extra HBM pass over the activations).
    x_pad = jnp.pad(x_nchw.astype(jnp.float32), ((0, 0), (0, 0), (1, 1), (1, 1)))
    x_flat = x_pad.reshape(N, Cin, Hp * Wp)
    x_flat = jnp.pad(x_flat, ((0, 0), (0, 0), (0, Px - Hp * Wp))).astype(param_dtype)

    # column m is a real output pixel iff (m mod Wp) < W
    cols = jnp.arange(M, dtype=jnp.int32) % Wp
    mask = (cols < W).astype(jnp.float32).reshape(1, M)

    w1c = w1c.astype(param_dtype)
    w2c = w2c.astype(param_dtype)

    kernel = functools.partial(doubleres_kernel, Wp=Wp, M=M, Cout=Cout)

    out_flat = pl.pallas_call(
        kernel,
        out_shape=jax.ShapeDtypeStruct((N, Cout, M), jnp.float32),
        grid_spec=pltpu.PrefetchScalarGridSpec(
            num_scalar_prefetch=0,
            grid=(N,),
            in_specs=[
                pl.BlockSpec((1, Cin, Px), lambda n: (n, 0, 0)),   # one image per step
                pl.BlockSpec(w1c.shape, lambda n: (0, 0)),          # (2*Cout, 9*Cin)
                pl.BlockSpec(bcat.shape, lambda n: (0, 0)),         # (2*Cout, 1)
                pl.BlockSpec(w2c.shape, lambda n: (0, 0)),          # (Cout, 9*Cout)
                pl.BlockSpec(b2.shape, lambda n: (0, 0)),           # (Cout, 1)
                pl.BlockSpec(mask.shape, lambda n: (0, 0)),         # (1, M)
            ],
            out_specs=pl.BlockSpec((1, Cout, M), lambda n: (n, 0, 0)),
            scratch_shapes=[pltpu.VMEM((Cout, Px), jnp.float32)],
        ),
        compiler_params=pltpu.CompilerParams(
            dimension_semantics=("parallel",)),
    )(x_flat, w1c, bcat, w2c, b2, mask)

    # lane-dense -> NCHW: drop the two wrapped padding columns per row
    return out_flat.reshape(N, Cout, H, Wp)[:, :, :, :W]


def make_raw_params(key, in_channels, out_channels):
    """Deterministic synthetic parameters (PyTorch layouts: OIHW conv weights)."""
    ks = jax.random.split(key, 6)
    s = 0.1
    w1 = s * jax.random.normal(ks[0], (out_channels, in_channels, 3, 3), jnp.float32)
    w2 = s * jax.random.normal(ks[1], (out_channels, out_channels, 3, 3), jnp.float32)
    wd = s * jax.random.normal(ks[2], (out_channels, in_channels, 1, 1), jnp.float32)

    def bn_params(k):
        k1, k2, k3, k4 = jax.random.split(k, 4)
        gamma = 1.0 + 0.1 * jax.random.normal(k1, (out_channels,), jnp.float32)
        beta = 0.1 * jax.random.normal(k2, (out_channels,), jnp.float32)
        mean = 0.1 * jax.random.normal(k3, (out_channels,), jnp.float32)
        var = 0.5 + jnp.abs(jax.random.normal(k4, (out_channels,), jnp.float32))
        return gamma, beta, mean, var

    return dict(w1=w1, w2=w2, wd=wd,
                bn1=bn_params(ks[3]), bn2=bn_params(ks[4]), bnd=bn_params(ks[5]))


def fold_params(raw, eps=1e-5):
    """Fold eval-mode BatchNorm into conv weights/bias; build im2col-stacked weights."""
    def fold(w, bn):
        gamma, beta, mean, var = bn
        scale = gamma / jnp.sqrt(var + eps)
        return w * scale[:, None, None, None], beta - mean * scale

    w1f, b1 = fold(raw["w1"], raw["bn1"])
    w2f, b2 = fold(raw["w2"], raw["bn2"])
    wdf, bd = fold(raw["wd"], raw["bnd"])
    Cout, Cin = w1f.shape[0], w1f.shape[1]

    # (Cout, Cin, 3, 3) -> (Cout, 9*Cin), column index = (dy*3 + dx)*Cin + ci
    w1_flat = jnp.transpose(w1f, (0, 2, 3, 1)).reshape(Cout, 9 * Cin)
    w2_flat = jnp.transpose(w2f, (0, 2, 3, 1)).reshape(Cout, 9 * Cout)

    # downsample 1x1 lives in the centre-tap (t = 4) block of the combined conv1 matmul
    wd_rows = jnp.zeros((Cout, 9 * Cin), jnp.float32)
    wd_rows = wd_rows.at[:, 4 * Cin:5 * Cin].set(wdf[:, :, 0, 0])

    w1c = jnp.concatenate([w1_flat, wd_rows], axis=0)          # (2*Cout, 9*Cin)
    bcat = jnp.concatenate([b1, bd]).reshape(2 * Cout, 1)      # (2*Cout, 1)
    return w1c, bcat, w2_flat, b2.reshape(Cout, 1)


def reference_forward(x, raw, eps=1e-5):
    """Pure-JAX/XLA reference of the same math (eval-mode BN)."""
    def conv(a, w, pad):
        return jax.lax.conv_general_dilated(
            a, w, window_strides=(1, 1), padding=((pad, pad), (pad, pad)),
            dimension_numbers=("NCHW", "OIHW", "NCHW"))

    def bn(a, p):
        gamma, beta, mean, var = p
        scale = gamma / jnp.sqrt(var + eps)
        return a * scale[None, :, None, None] + (beta - mean * scale)[None, :, None, None]

    residual = bn(conv(x, raw["wd"], 0), raw["bnd"])
    h = jnp.maximum(bn(conv(x, raw["w1"], 1), raw["bn1"]), 0.0)
    y = bn(conv(h, raw["w2"], 1), raw["bn2"])
    return jnp.maximum(y + residual, 0.0)


if __name__ == "__main__":
    # Small shapes consistent with the module's forward.
    N, Cin, H, W = 2, 4, 16, 16
    Cout = 8

    key = jax.random.PRNGKey(0)
    kx, kp = jax.random.split(key)
    x = jax.random.normal(kx, (N, Cin, H, W), jnp.float32)
    raw = make_raw_params(kp, Cin, Cout)
    params = fold_params(raw)
    ref = reference_forward(x, raw)

    # f32 run: exact validation against the f32 XLA reference.
    out_f32 = jax.block_until_ready(doubleres_forward(x, params, param_dtype=jnp.float32))
    assert out_f32.shape == (N, Cout, H, W)
    err_f32 = float(jnp.max(jnp.abs(out_f32 - ref)))
    assert jnp.allclose(out_f32, ref, atol=1e-4, rtol=1e-4), err_f32

    # bf16 weights/activations with f32 accumulation: halves HBM traffic, bf16 MXU rate.
    out_bf16 = jax.block_until_ready(doubleres_forward(x, params, param_dtype=jnp.bfloat16))
    err_bf16 = float(jnp.max(jnp.abs(out_bf16 - ref)))
    assert jnp.allclose(out_bf16, ref, atol=5e-2, rtol=5e-2), err_bf16

    print("KERNEL_OK")
</pallas_src>

<mosaic_0001>
module attributes {stable_mosaic.version = 11 : i64} {
  func.func @doubleres_kernel(%arg0: i32, %arg1: memref<1x4x326xf32, #tpu.memory_space<vmem>>, %arg2: memref<16x36xf32, #tpu.memory_space<vmem>>, %arg3: memref<16x1xf32, #tpu.memory_space<vmem>>, %arg4: memref<8x72xf32, #tpu.memory_space<vmem>>, %arg5: memref<8x1xf32, #tpu.memory_space<vmem>>, %arg6: memref<1x288xf32, #tpu.memory_space<vmem>>, %arg7: memref<1x8x288xf32, #tpu.memory_space<vmem>>, %arg8: memref<8x326xf32, #tpu.memory_space<vmem>>) attributes {dimension_semantics = [#tpu.dimension_semantics<parallel>], iteration_bounds = array<i64: 2>, scalar_prefetch = 0 : i64, scratch_operands = 1 : i64, tpu.core_type = #tpu.core_type<tc>, window_params = [{transform_indices = @transform_0, window_bounds = array<i64: 1, 4, 326>}, {pipeline_mode = #tpu.pipeline_mode<synchronous>, transform_indices = @transform_1, window_bounds = array<i64: 16, 36>}, {pipeline_mode = #tpu.pipeline_mode<synchronous>, transform_indices = @transform_2, window_bounds = array<i64: 16, 1>}, {pipeline_mode = #tpu.pipeline_mode<synchronous>, transform_indices = @transform_3, window_bounds = array<i64: 8, 72>}, {pipeline_mode = #tpu.pipeline_mode<synchronous>, transform_indices = @transform_4, window_bounds = array<i64: 8, 1>}, {pipeline_mode = #tpu.pipeline_mode<synchronous>, transform_indices = @transform_5, window_bounds = array<i64: 1, 288>}, {transform_indices = @transform_6, window_bounds = array<i64: 1, 8, 288>}]} {
    %c0 = arith.constant 0 : index
    %c0_0 = arith.constant 0 : index
    %0 = vector.load %arg6[%c0, %c0_0] : memref<1x288xf32, #tpu.memory_space<vmem>>, vector<1x288xf32>
    %c0_1 = arith.constant 0 : index
    %c0_2 = arith.constant 0 : index
    %c0_3 = arith.constant 0 : index
    %1 = vector.load %arg1[%c0_1, %c0_2, %c0_3] : memref<1x4x326xf32, #tpu.memory_space<vmem>>, vector<1x4x326xf32>
    %2 = vector.shape_cast %1 : vector<1x4x326xf32> to vector<4x326xf32>
    %3 = vector.extract_strided_slice %2 {offsets = [0, 0], sizes = [4, 288], strides = [1, 1]} : vector<4x326xf32> to vector<4x288xf32>
    %4 = vector.extract_strided_slice %2 {offsets = [0, 1], sizes = [4, 288], strides = [1, 1]} : vector<4x326xf32> to vector<4x288xf32>
    %5 = vector.extract_strided_slice %2 {offsets = [0, 2], sizes = [4, 288], strides = [1, 1]} : vector<4x326xf32> to vector<4x288xf32>
    %6 = vector.extract_strided_slice %2 {offsets = [0, 18], sizes = [4, 288], strides = [1, 1]} : vector<4x326xf32> to vector<4x288xf32>
    %7 = vector.extract_strided_slice %2 {offsets = [0, 19], sizes = [4, 288], strides = [1, 1]} : vector<4x326xf32> to vector<4x288xf32>
    %8 = vector.extract_strided_slice %2 {offsets = [0, 20], sizes = [4, 288], strides = [1, 1]} : vector<4x326xf32> to vector<4x288xf32>
    %9 = vector.extract_strided_slice %2 {offsets = [0, 36], sizes = [4, 288], strides = [1, 1]} : vector<4x326xf32> to vector<4x288xf32>
    %10 = vector.extract_strided_slice %2 {offsets = [0, 37], sizes = [4, 288], strides = [1, 1]} : vector<4x326xf32> to vector<4x288xf32>
    %11 = vector.extract_strided_slice %2 {offsets = [0, 38], sizes = [4, 288], strides = [1, 1]} : vector<4x326xf32> to vector<4x288xf32>
    %12 = tpu.concatenate %3, %4, %5, %6, %7, %8, %9, %10, %11 in 0 : vector<4x288xf32>, vector<4x288xf32>, vector<4x288xf32>, vector<4x288xf32>, vector<4x288xf32>, vector<4x288xf32>, vector<4x288xf32>, vector<4x288xf32>, vector<4x288xf32> -> vector<36x288xf32>
    %c0_4 = arith.constant 0 : index
    %c0_5 = arith.constant 0 : index
    %13 = vector.load %arg2[%c0_4, %c0_5] : memref<16x36xf32, #tpu.memory_space<vmem>>, vector<16x36xf32>
    %cst = arith.constant dense<0.000000e+00> : vector<16x288xf32>
    %14 = tpu.matmul %13, %12, %cst {dimension_numbers = #tpu.dot_dimension_numbers<[1], [0], [0], [1], [0, 0, 1, 1], [], []>} : vector<16x36xf32>, vector<36x288xf32>, vector<16x288xf32> -> vector<16x288xf32>
    %c0_6 = arith.constant 0 : index
    %c0_7 = arith.constant 0 : index
    %15 = vector.load %arg3[%c0_6, %c0_7] : memref<16x1xf32, #tpu.memory_space<vmem>>, vector<16x1xf32>
    %16 = vector.broadcast %15 : vector<16x1xf32> to vector<16x288xf32>
    %17 = arith.addf %14, %16 : vector<16x288xf32>
    %18 = vector.extract_strided_slice %17 {offsets = [0, 0], sizes = [8, 288], strides = [1, 1]} : vector<16x288xf32> to vector<8x288xf32>
    %cst_8 = arith.constant 0.000000e+00 : f32
    %19 = vector.broadcast %cst_8 : f32 to vector<8x288xf32>
    %20 = arith.maximumf %18, %19 : vector<8x288xf32>
    %21 = vector.broadcast %0 : vector<1x288xf32> to vector<8x288xf32>
    %22 = arith.mulf %20, %21 : vector<8x288xf32>
    %23 = vector.extract_strided_slice %17 {offsets = [8, 0], sizes = [8, 288], strides = [1, 1]} : vector<16x288xf32> to vector<8x288xf32>
    %c0_9 = arith.constant 0 : index
    %c19 = arith.constant 19 : index
    %24 = vector.load %arg8[%c0_9, %c19] : memref<8x326xf32, #tpu.memory_space<vmem>>, vector<8x288xf32>
    tpu.vector_store %arg8[%c0_9, %c19], %22 {strides = array<i32>} : memref<8x326xf32, #tpu.memory_space<vmem>>, vector<8x288xf32>,
    %cst_10 = arith.constant 0.000000e+00 : f32
    %25 = vector.broadcast %cst_10 : f32 to vector<8x19xf32>
    %c0_11 = arith.constant 0 : index
    %c0_12 = arith.constant 0 : index
    %26 = vector.load %arg8[%c0_11, %c0_12] : memref<8x326xf32, #tpu.memory_space<vmem>>, vector<8x19xf32>
    tpu.vector_store %arg8[%c0_11, %c0_12], %25 {strides = array<i32>} : memref<8x326xf32, #tpu.memory_space<vmem>>, vector<8x19xf32>,
    %cst_13 = arith.constant 0.000000e+00 : f32
    %27 = vector.broadcast %cst_13 : f32 to vector<8x19xf32>
    %c0_14 = arith.constant 0 : index
    %c307 = arith.constant 307 : index
    %28 = vector.load %arg8[%c0_14, %c307] : memref<8x326xf32, #tpu.memory_space<vmem>>, vector<8x19xf32>
    tpu.vector_store %arg8[%c0_14, %c307], %27 {strides = array<i32>} : memref<8x326xf32, #tpu.memory_space<vmem>>, vector<8x19xf32>,
    %c0_15 = arith.constant 0 : index
    %c0_16 = arith.constant 0 : index
    %29 = vector.load %arg8[%c0_15, %c0_16] : memref<8x326xf32, #tpu.memory_space<vmem>>, vector<8x326xf32>
    %30 = vector.extract_strided_slice %29 {offsets = [0, 0], sizes = [8, 288], strides = [1, 1]} : vector<8x326xf32> to vector<8x288xf32>
    %31 = vector.extract_strided_slice %29 {offsets = [0, 1], sizes = [8, 288], strides = [1, 1]} : vector<8x326xf32> to vector<8x288xf32>
    %32 = vector.extract_strided_slice %29 {offsets = [0, 2], sizes = [8, 288], strides = [1, 1]} : vector<8x326xf32> to vector<8x288xf32>
    %33 = vector.extract_strided_slice %29 {offsets = [0, 18], sizes = [8, 288], strides = [1, 1]} : vector<8x326xf32> to vector<8x288xf32>
    %34 = vector.extract_strided_slice %29 {offsets = [0, 19], sizes = [8, 288], strides = [1, 1]} : vector<8x326xf32> to vector<8x288xf32>
    %35 = vector.extract_strided_slice %29 {offsets = [0, 20], sizes = [8, 288], strides = [1, 1]} : vector<8x326xf32> to vector<8x288xf32>
    %36 = vector.extract_strided_slice %29 {offsets = [0, 36], sizes = [8, 288], strides = [1, 1]} : vector<8x326xf32> to vector<8x288xf32>
    %37 = vector.extract_strided_slice %29 {offsets = [0, 37], sizes = [8, 288], strides = [1, 1]} : vector<8x326xf32> to vector<8x288xf32>
    %38 = vector.extract_strided_slice %29 {offsets = [0, 38], sizes = [8, 288], strides = [1, 1]} : vector<8x326xf32> to vector<8x288xf32>
    %39 = tpu.concatenate %30, %31, %32, %33, %34, %35, %36, %37, %38 in 0 : vector<8x288xf32>, vector<8x288xf32>, vector<8x288xf32>, vector<8x288xf32>, vector<8x288xf32>, vector<8x288xf32>, vector<8x288xf32>, vector<8x288xf32>, vector<8x288xf32> -> vector<72x288xf32>
    %c0_17 = arith.constant 0 : index
    %c0_18 = arith.constant 0 : index
    %40 = vector.load %arg4[%c0_17, %c0_18] : memref<8x72xf32, #tpu.memory_space<vmem>>, vector<8x72xf32>
    %cst_19 = arith.constant dense<0.000000e+00> : vector<8x288xf32>
    %41 = tpu.matmul %40, %39, %cst_19 {dimension_numbers = #tpu.dot_dimension_numbers<[1], [0], [0], [1], [0, 0, 1, 1], [], []>} : vector<8x72xf32>, vector<72x288xf32>, vector<8x288xf32> -> vector<8x288xf32>
    %c0_20 = arith.constant 0 : index
    %c0_21 = arith.constant 0 : index
    %42 = vector.load %arg5[%c0_20, %c0_21] : memref<8x1xf32, #tpu.memory_space<vmem>>, vector<8x1xf32>
    %43 = vector.broadcast %42 : vector<8x1xf32> to vector<8x288xf32>
    %44 = arith.addf %41, %43 : vector<8x288xf32>
    %45 = arith.addf %44, %23 : vector<8x288xf32>
    %cst_22 = arith.constant 0.000000e+00 : f32
    %46 = vector.broadcast %cst_22 : f32 to vector<8x288xf32>
    %47 = arith.maximumf %45, %46 : vector<8x288xf32>
    %c0_23 = arith.constant 0 : index
    %c0_24 = arith.constant 0 : index
    %c0_25 = arith.constant 0 : index
    %48 = vector.load %arg7[%c0_23, %c0_24, %c0_25] : memref<1x8x288xf32, #tpu.memory_space<vmem>>, vector<1x8x288xf32>
    %49 = vector.shape_cast %48 : vector<1x8x288xf32> to vector<8x288xf32>
    %50 = vector.shape_cast %47 : vector<8x288xf32> to vector<1x8x288xf32>
    tpu.vector_store %arg7[%c0_23, %c0_24, %c0_25], %50 {strides = array<i32>} : memref<1x8x288xf32, #tpu.memory_space<vmem>>, vector<1x8x288xf32>,
    return
  }
  func.func @transform_0(%arg0: i32) -> (i32, i32, i32) {
    %c0_i32 = arith.constant 0 : i32
    %c0_i32_0 = arith.constant 0 : i32
    %c0_i32_1 = arith.constant 0 : i32
    return %arg0, %c0_i32, %c0_i32_0 : i32, i32, i32
  }
  func.func @transform_1(%arg0: i32) -> (i32, i32) {
    %c0_i32 = arith.constant 0 : i32
    %c0_i32_0 = arith.constant 0 : i32
    %c0_i32_1 = arith.constant 0 : i32
    return %c0_i32, %c0_i32_0 : i32, i32
  }
  func.func @transform_2(%arg0: i32) -> (i32, i32) {
    %c0_i32 = arith.constant 0 : i32
    %c0_i32_0 = arith.constant 0 : i32
    %c0_i32_1 = arith.constant 0 : i32
    return %c0_i32, %c0_i32_0 : i32, i32
  }
  func.func @transform_3(%arg0: i32) -> (i32, i32) {
    %c0_i32 = arith.constant 0 : i32
    %c0_i32_0 = arith.constant 0 : i32
    %c0_i32_1 = arith.constant 0 : i32
    return %c0_i32, %c0_i32_0 : i32, i32
  }
  func.func @transform_4(%arg0: i32) -> (i32, i32) {
    %c0_i32 = arith.constant 0 : i32
    %c0_i32_0 = arith.constant 0 : i32
    %c0_i32_1 = arith.constant 0 : i32
    return %c0_i32, %c0_i32_0 : i32, i32
  }
  func.func @transform_5(%arg0: i32) -> (i32, i32) {
    %c0_i32 = arith.constant 0 : i32
    %c0_i32_0 = arith.constant 0 : i32
    %c0_i32_1 = arith.constant 0 : i32
    return %c0_i32, %c0_i32_0 : i32, i32
  }
  func.func @transform_6(%arg0: i32) -> (i32, i32, i32) {
    %c0_i32 = arith.constant 0 : i32
    %c0_i32_0 = arith.constant 0 : i32
    %c0_i32_1 = arith.constant 0 : i32
    return %arg0, %c0_i32, %c0_i32_0 : i32, i32, i32
  }
}

</mosaic_0001>

<llo_original>
// kernel: tpu_custom_call.1
$region0: #{tpu_custom_call.1}
  #allocation0 [shape = 'u32[]', space=smem, size = 0x4, offset = 0x4, fixed_abs, tag = 'smem constant byte address 0x4 - core index']
  #allocation1 [shape = 'u32[72,128]{1,0:T(1,128)}', space=vmem, size = 0x9000, scoped, tag = 'internal scratch']
  #allocation2 [shape = 'f32[8,326]{1,0:T(8,128)}', space=vmem, size = 0x3000, scoped, tag = 'scratch operand']
  %s0 = inlined_call_operand.vmem [shape: f32[2,4,326], index: 0, kind: input, shape index: {}]
  %s1 = inlined_call_operand.hbm [shape: f32[16,36], index: 1, kind: input, shape index: {}]
  %s2 = inlined_call_operand.vmem [shape: f32[16,1], index: 2, kind: input, shape index: {}]
  %s3 = inlined_call_operand.hbm [shape: f32[8,72], index: 3, kind: input, shape index: {}]
  %s4 = inlined_call_operand.vmem [shape: f32[8,1], index: 4, kind: input, shape index: {}]
  %s5 = inlined_call_operand.vmem [shape: f32[1,288], index: 5, kind: input, shape index: {}]
  %s6 = inlined_call_operand.hbm [shape: f32[2,8,288], index: 6, kind: output, shape index: {}]
  %s7 = sld [smem:[#allocation0]]
  $region65: #{tpu_custom_call.1} parent=0
    _
  %s9 = ssub.s32 1, %s7
  %s10 = scalar_select 0, %s9, %s7
  $region1: #{tpu_custom_call.1} parent=0
    #allocation3 [shape = 'u8[8192]{0}', space=vmem, size = 0x2000, scoped, tag = 'input window, operand 1, single buffered']
    #allocation4 [shape = 's32[2]{0}', space=sflag, size = 0x8, scoped, tag = 'scoped memory for tpu_custom_call.1']
    #allocation5 [shape = 's32[2]{0}', space=sflag, size = 0x8, scoped, tag = 'scoped memory for tpu_custom_call.1']
    #allocation6 [shape = 'u8[4096]{0}', space=vmem, size = 0x1000, scoped, tag = 'input window, operand 3, single buffered']
    #allocation7 [shape = 's32[1]{0}', space=sflag, size = 0x4, scoped, tag = 'scoped memory for tpu_custom_call.1']
    #allocation8 [shape = 'u8[24576]{0}', space=vmem, size = 0x6000, scoped, tag = 'output window, operand 0']
    %11 = vsyncpa [#allocation4], 0
    %12 = vsyncpa [#allocation7], 0
    %13 = vsyncpa [#allocation5], 0
    %s14 = scalar_lea.sflag [#allocation5], 1
    %15 = vsyncpa %s14, 0
    loop: start=0, step=1, limit=4
    $region2: #{tpu_custom_call.1} parent=1 // loop_pre_header
      _
    $region3: #{tpu_custom_call.1} parent=1 // loop_header
      %s17 = sphi 0, %s21
      %p18 = scmp.ge.s32.totalorder %s17, 4
      %s27 = sphi 0, %s29
      %s30 = sphi 0, %s27
      %s31 = sphi 0, %s30
      %s47 = sphi 0, %s31
      %s51 = sphi 0, %s51
      %s53 = sphi 0, %s51
      %s54 = sphi 0, %s53
      %s68 = sphi 0, %s54
      %s72 = sphi 0, %s72
      %s74 = sphi 0, %s72
      %s75 = sphi 0, %s74
      %s89 = sphi 0, %s75
      %s93 = sphi 0, %s93
      %s95 = sphi 0, %s93
      %s96 = sphi 0, %s95
      %s110 = sphi 0, %s96
      %s114 = sphi 0, %s114
      %s116 = sphi 0, %s114
      %s117 = sphi 0, %s116
      %s131 = sphi 0, %s117
      %s135 = sphi 0, %s135
      %s137 = sphi 0, %s135
      %s138 = sphi 0, %s137
      %s152 = sphi 0, %s138
      %s158 = sphi 0, %s160
      %s161 = sphi 0, %s158
      %s162 = sphi 0, %s161
      %s178 = sphi 0, %s162
    $region4: #{tpu_custom_call.1} parent=1 // loop_header_branch
      %20 = sbr.rel (%p18) target = $region8
    $region5: #{tpu_custom_call.1} parent=1 // loop_body
      %s22 = ssub.s32 %s17, 1
      %s23 = ssub.s32 %s17, 2
      %s24 = sadd.s32 %s17, 1
      %s25 = ssub.s32 %s17, %s24
      %p26 = scmp.eq.s32.totalorder %s25, 0
      %s28 = sadd.s32 %s27, 1
      %s29 = scalar_select %p26, %s27, %s28
      %p32 = pneg %p26
      %p33 = scmp.eq.s32.totalorder %s17, 1
      %p34 = por %p32, %p33
      %p35 = scmp.ne.s32.totalorder %s27, %s30
      %p36 = scmp.eq.s32.totalorder %s17, 0
      %p37 = por %p35, %p36
      %p38 = scmp.ne.s32.totalorder %s27, %s30
      %p39 = scmp.eq.s32.totalorder %s22, 1
      %p40 = por %p38, %p39
      %p41 = scmp.ne.s32.totalorder %s30, %s31
      %p42 = scmp.eq.s32.totalorder %s22, 0
      %p43 = por %p41, %p42
      %p44 = scmp.ne.s32.totalorder %s30, %s31
      %p45 = scmp.eq.s32.totalorder %s23, 1
      %p46 = por %p44, %p45
      %p48 = scmp.ne.s32.totalorder %s31, %s47
      %p49 = scmp.eq.s32.totalorder %s23, 0
      %p50 = por %p48, %p49
      %s52 = sadd.s32 %s51, 1
      %p55 = scmp.eq.s32.totalorder %s17, 1
      %p56 = scmp.ne.s32.totalorder %s51, %s53
      %p57 = scmp.eq.s32.totalorder %s17, 0
      %p58 = por %p56, %p57
      %p59 = scmp.ne.s32.totalorder %s51, %s53
      %p60 = scmp.eq.s32.totalorder %s22, 1
      %p61 = por %p59, %p60
      %p62 = scmp.ne.s32.totalorder %s53, %s54
      %p63 = scmp.eq.s32.totalorder %s22, 0
      %p64 = por %p62, %p63
      %p65 = scmp.ne.s32.totalorder %s53, %s54
      %p66 = scmp.eq.s32.totalorder %s23, 1
      %p67 = por %p65, %p66
      %p69 = scmp.ne.s32.totalorder %s54, %s68
      %p70 = scmp.eq.s32.totalorder %s23, 0
      %p71 = por %p69, %p70
      %s73 = sadd.s32 %s72, 1
      %p76 = scmp.eq.s32.totalorder %s17, 1
      %p77 = scmp.ne.s32.totalorder %s72, %s74
      %p78 = scmp.eq.s32.totalorder %s17, 0
      %p79 = por %p77, %p78
      %p80 = scmp.ne.s32.totalorder %s72, %s74
      %p81 = scmp.eq.s32.totalorder %s22, 1
      %p82 = por %p80, %p81
      %p83 = scmp.ne.s32.totalorder %s74, %s75
      %p84 = scmp.eq.s32.totalorder %s22, 0
      %p85 = por %p83, %p84
      %p86 = scmp.ne.s32.totalorder %s74, %s75
      %p87 = scmp.eq.s32.totalorder %s23, 1
      %p88 = por %p86, %p87
      %p90 = scmp.ne.s32.totalorder %s75, %s89
      %p91 = scmp.eq.s32.totalorder %s23, 0
      %p92 = por %p90, %p91
      %s94 = sadd.s32 %s93, 1
      %p97 = scmp.eq.s32.totalorder %s17, 1
      %p98 = scmp.ne.s32.totalorder %s93, %s95
      %p99 = scmp.eq.s32.totalorder %s17, 0
      %p100 = por %p98, %p99
      %p101 = scmp.ne.s32.totalorder %s93, %s95
      %p102 = scmp.eq.s32.totalorder %s22, 1
      %p103 = por %p101, %p102
      %p104 = scmp.ne.s32.totalorder %s95, %s96
      %p105 = scmp.eq.s32.totalorder %s22, 0
      %p106 = por %p104, %p105
      %p107 = scmp.ne.s32.totalorder %s95, %s96
      %p108 = scmp.eq.s32.totalorder %s23, 1
      %p109 = por %p107, %p108
      %p111 = scmp.ne.s32.totalorder %s96, %s110
      %p112 = scmp.eq.s32.totalorder %s23, 0
      %p113 = por %p111, %p112
      %s115 = sadd.s32 %s114, 1
      %p118 = scmp.eq.s32.totalorder %s17, 1
      %p119 = scmp.ne.s32.totalorder %s114, %s116
      %p120 = scmp.eq.s32.totalorder %s17, 0
      %p121 = por %p119, %p120
      %p122 = scmp.ne.s32.totalorder %s114, %s116
      %p123 = scmp.eq.s32.totalorder %s22, 1
      %p124 = por %p122, %p123
      %p125 = scmp.ne.s32.totalorder %s116, %s117
      %p126 = scmp.eq.s32.totalorder %s22, 0
      %p127 = por %p125, %p126
      %p128 = scmp.ne.s32.totalorder %s116, %s117
      %p129 = scmp.eq.s32.totalorder %s23, 1
      %p130 = por %p128, %p129
      %p132 = scmp.ne.s32.totalorder %s117, %s131
      %p133 = scmp.eq.s32.totalorder %s23, 0
      %p134 = por %p132, %p133
      %s136 = sadd.s32 %s135, 1
      %p139 = scmp.eq.s32.totalorder %s17, 1
      %p140 = scmp.ne.s32.totalorder %s135, %s137
      %p141 = scmp.eq.s32.totalorder %s17, 0
      %p142 = por %p140, %p141
      %p143 = scmp.ne.s32.totalorder %s135, %s137
      %p144 = scmp.eq.s32.totalorder %s22, 1
      %p145 = por %p143, %p144
      %p146 = scmp.ne.s32.totalorder %s137, %s138
      %p147 = scmp.eq.s32.totalorder %s22, 0
      %p148 = por %p146, %p147
      %p149 = scmp.ne.s32.totalorder %s137, %s138
      %p150 = scmp.eq.s32.totalorder %s23, 1
      %p151 = por %p149, %p150
      %p153 = scmp.ne.s32.totalorder %s138, %s152
      %p154 = scmp.eq.s32.totalorder %s23, 0
      %p155 = por %p153, %p154
      %s156 = ssub.s32 %s17, %s24
      %p157 = scmp.eq.s32.totalorder %s156, 0
      %s159 = sadd.s32 %s158, 1
      %s160 = scalar_select %p157, %s158, %s159
      %p163 = pneg %p157
      %p164 = scmp.eq.s32.totalorder %s17, 1
      %p165 = por %p163, %p164
      %p166 = scmp.ne.s32.totalorder %s158, %s161
      %p167 = scmp.eq.s32.totalorder %s17, 0
      %p168 = por %p166, %p167
      %p169 = scmp.ne.s32.totalorder %s158, %s161
      %p170 = scmp.eq.s32.totalorder %s22, 1
      %p171 = por %p169, %p170
      %p172 = scmp.ne.s32.totalorder %s161, %s162
      %p173 = scmp.eq.s32.totalorder %s22, 0
      %p174 = por %p172, %p173
      %p175 = scmp.ne.s32.totalorder %s161, %s162
      %p176 = scmp.eq.s32.totalorder %s23, 1
      %p177 = por %p175, %p176
      %p179 = scmp.ne.s32.totalorder %s162, %s178
      %p180 = scmp.eq.s32.totalorder %s23, 0
      %p181 = por %p179, %p180
      %p182 = scmp.le.s32.totalorder 1, %s17
      %p183 = scmp.lt.s32.totalorder %s17, 3
      %p184 = pnand %p182, %p183
      %p185 = pneg %p184
      // Predicated region
      $region9: #{tpu_custom_call.1} parent=5 // pred_check
        _
      $region10: #{tpu_custom_call.1} parent=5 // pred_check_branch
        %187 = sbr.rel (%p184) target = $region12
      $region11: #{tpu_custom_call.1} parent=5 // pred_region
        %s188 = ssub.s32 %s17, 1
        // Predicated region
        $region13: #{tpu_custom_call.1} parent=11 // pred_check
          %p189 = pneg %p64
        $region14: #{tpu_custom_call.1} parent=11 // pred_check_branch
          %191 = sbr.rel (%p189) target = $region16
        $region15: #{tpu_custom_call.1} parent=11 // pred_region
          %193 = vsyncadd [#allocation4], 0
          %s194 = sshll.u32 %s1, 4
          %s195 = int_to_ptr.hbm [resolvable:$true] %s194
          %s196 = sshll.u32 [#allocation3], 4
          %s197 = int_to_ptr.vmem [resolvable:$true] %s196
          %202 = dma.hbm_to_vmem [thread:$0]  %s195, 256, %s197, [#allocation4], 128, 128, 8
        $region16: #{tpu_custom_call.1} parent=11 // pred_fallthru
          _
        // Predicated region
        $region17: #{tpu_custom_call.1} parent=11 // pred_check
          %p203 = pneg %p85
        $region18: #{tpu_custom_call.1} parent=11 // pred_check_branch
          %205 = sbr.rel (%p203) target = $region20
        $region19: #{tpu_custom_call.1} parent=11 // pred_region
          _
        $region20: #{tpu_custom_call.1} parent=11 // pred_fallthru
          _
        // Predicated region
        $region21: #{tpu_custom_call.1} parent=11 // pred_check
          %p206 = pneg %p106
        $region22: #{tpu_custom_call.1} parent=11 // pred_check_branch
          %208 = sbr.rel (%p206) target = $region24
        $region23: #{tpu_custom_call.1} parent=11 // pred_region
          %210 = vsyncadd [#allocation7], 0
          %s212 = sshll.u32 %s3, 4
          %s213 = int_to_ptr.hbm [resolvable:$true] %s212
          %s214 = sshll.u32 [#allocation6], 4
          %s215 = int_to_ptr.vmem [resolvable:$true] %s214
          %217 = dma.hbm_to_vmem [thread:$0]  %s213, 128, %s215, [#allocation7]
        $region24: #{tpu_custom_call.1} parent=11 // pred_fallthru
          _
        // Predicated region
        $region25: #{tpu_custom_call.1} parent=11 // pred_check
          %p218 = pneg %p127
        $region26: #{tpu_custom_call.1} parent=11 // pred_check_branch
          %220 = sbr.rel (%p218) target = $region28
        $region27: #{tpu_custom_call.1} parent=11 // pred_region
          _
        $region28: #{tpu_custom_call.1} parent=11 // pred_fallthru
          _
        // Predicated region
        $region29: #{tpu_custom_call.1} parent=11 // pred_check
          %p221 = pneg %p148
        $region30: #{tpu_custom_call.1} parent=11 // pred_check_branch
          %223 = sbr.rel (%p221) target = $region32
        $region31: #{tpu_custom_call.1} parent=11 // pred_region
          _
        $region32: #{tpu_custom_call.1} parent=11 // pred_fallthru
          _
      $region12: #{tpu_custom_call.1} parent=5 // pred_fallthru
        _
      %p224 = scmp.lt.s32.totalorder %s17, 2
      // Predicated region
      $region33: #{tpu_custom_call.1} parent=5 // pred_check
        %p225 = pneg %p224
      $region34: #{tpu_custom_call.1} parent=5 // pred_check_branch
        %227 = sbr.rel (%p225) target = $region36
      $region35: #{tpu_custom_call.1} parent=5 // pred_region
        // Predicated region
        $region37: #{tpu_custom_call.1} parent=35 // pred_check
          %p228 = pneg %p37
        $region38: #{tpu_custom_call.1} parent=35 // pred_check_branch
          %230 = sbr.rel (%p228) target = $region40
        $region39: #{tpu_custom_call.1} parent=35 // pred_region
          %p231 = scmp.lt.s32.totalorder %s17, 1
          %s232 = scalar_select %p231, %s17, 1
          %s233 = smul.addr %s232, 3
          %s234 = smul.addr %s233, 4
          %s235 = scalar_lea.vmem %s0, %s234
        $region40: #{tpu_custom_call.1} parent=35 // pred_fallthru
          _
      $region36: #{tpu_custom_call.1} parent=5 // pred_fallthru
        _
      %p236 = scmp.le.s32.totalorder 1, %s17
      %p237 = scmp.lt.s32.totalorder %s17, 3
      %p238 = pnand %p236, %p237
      %p239 = pneg %p238
      // Predicated region
      $region41: #{tpu_custom_call.1} parent=5 // pred_check
        _
      $region42: #{tpu_custom_call.1} parent=5 // pred_check_branch
        %241 = sbr.rel (%p238) target = $region44
      $region43: #{tpu_custom_call.1} parent=5 // pred_region
        %s242 = ssub.s32 %s17, 1
        // Predicated region
        $region45: #{tpu_custom_call.1} parent=43 // pred_check
          %p243 = pneg %p64
        $region46: #{tpu_custom_call.1} parent=43 // pred_check_branch
          %245 = sbr.rel (%p243) target = $region48
        $region47: #{tpu_custom_call.1} parent=43 // pred_region
          %247 = dma.done [#allocation4], 256
        $region48: #{tpu_custom_call.1} parent=43 // pred_fallthru
          _
        // Predicated region
        $region49: #{tpu_custom_call.1} parent=43 // pred_check
          %p248 = pneg %p106
        $region50: #{tpu_custom_call.1} parent=43 // pred_check_branch
          %250 = sbr.rel (%p248) target = $region52
        $region51: #{tpu_custom_call.1} parent=43 // pred_region
          %252 = dma.done [#allocation7], 128
        $region52: #{tpu_custom_call.1} parent=43 // pred_fallthru
          _
        %p253 = scmp.lt.s32.totalorder %s22, 1
        %s254 = scalar_select %p253, %s22, 1
        %s255 = smul.addr %s254, 3
        %s256 = smul.addr %s255, 4
        %s257 = scalar_lea.vmem %s0, %s256
        %p258 = pneg %p43
        %p259 = pneg %p40
        %p260 = pneg %p64
        %p261 = pneg %p61
        %p262 = pneg %p85
        %p263 = pneg %p82
        %p264 = pneg %p106
        %p265 = pneg %p103
        %p266 = pneg %p127
        %p267 = pneg %p124
        %p268 = pneg %p148
        %p269 = pneg %p145
        %p270 = pneg %p174
        %p271 = pneg %p171
        %s272 = sand.u32 %s161, 1
        %s273 = scalar_lea.sflag [#allocation5], %s272
        %s274 = sand.u32 %s161, 1
        %s275 = smul.addr %s274, 24
        %s276 = scalar_lea.vmem [#allocation8], %s275
        %p277 = scmp.lt.s32.totalorder %s22, 1
        %s278 = scalar_select %p277, %s22, 1
        %s279 = smul.addr %s278, 3
        %s280 = smul.addr %s279, 4
        %s281 = scalar_lea.vmem %s0, %s280
        %v282 = vld [vmem:[%s5] sm:$0x7]
        %v283 = vld [vmem:[%s281] sm:$0xff]
        %v284 = vld [vmem:[%s281 + $0x8] sm:$0xf]
        %287 = vst [vmem:[#allocation1] ss:$2 sm:$0xff] %v283
        %s288 = scalar_lea.vmem [#allocation1], 16
        %289 = vst [vmem:[%s288] ss:$2 sm:$0xff] %v284
        %v290 = vld.sshfl [vmem:[#allocation1] sm:$0xff pattern:$0x75316420]
        %v291 = vld.sshfl [vmem:[#allocation1 + $0x8] sm:$0xff pattern:$0x75316420]
        %v292 = vld.sshfl [vmem:[#allocation1 + $0x10] sm:$0xff pattern:$0x75316420]
        %s296 = scalar_lea.vmem [#allocation1], 1
        %297 = vst [vmem:[%s296] ss:$2 sm:$0xff] %v283
        %s298 = scalar_lea.vmem [#allocation1], 17
        %299 = vst [vmem:[%s298] ss:$2 sm:$0xff] %v284
        %v300 = vld.sshfl [vmem:[#allocation1] sm:$0xff pattern:$0x75316420]
        %v301 = vld.sshfl [vmem:[#allocation1 + $0x8] sm:$0xff pattern:$0x75316420]
        %v302 = vld.sshfl [vmem:[#allocation1 + $0x10] sm:$0xff pattern:$0x75316420]
        %303 = vrot.lane.b32.xlu0 %v300, 127
        %v304 = vpop.permute.xlu0 %303
        %305 = vrot.lane.b32.xlu0 %v301, 127
        %v306 = vpop.permute.xlu0 %305
        %307 = vrot.lane.b32.xlu0 %v302, 127
        %v308 = vpop.permute.xlu0 %307
        %vm309 = vcmask 1039360
        %v310 = vsel %vm309, %v304, %v306
        %v311 = vsel %vm309, %v306, %v308
        %315 = vst [vmem:[#allocation1] ss:$2 sm:$0xff] %v283
        %s316 = scalar_lea.vmem [#allocation1], 16
        %317 = vst [vmem:[%s316] ss:$2 sm:$0xff] %v284
        %v318 = vld.sshfl [vmem:[#allocation1] sm:$0xff pattern:$0x75316420]
        %v319 = vld.sshfl [vmem:[#allocation1 + $0x8] sm:$0xff pattern:$0x75316420]
        %v320 = vld.sshfl [vmem:[#allocation1 + $0x10] sm:$0xff pattern:$0x75316420]
        %321 = vrot.lane.b32.xlu0 %v318, 126
        %v322 = vpop.permute.xlu0 %321
        %323 = vrot.lane.b32.xlu0 %v319, 126
        %v324 = vpop.permute.xlu0 %323
        %325 = vrot.lane.b32.xlu0 %v320, 126
        %v326 = vpop.permute.xlu0 %325
        %vm327 = vcmask 1031168
        %v328 = vsel %vm327, %v322, %v324
        %v329 = vsel %vm327, %v324, %v326
        %s333 = scalar_lea.vmem [#allocation1], 1
        %334 = vst [vmem:[%s333] ss:$2 sm:$0xff] %v283
        %s335 = scalar_lea.vmem [#allocation1], 17
        %336 = vst [vmem:[%s335] ss:$2 sm:$0xff] %v284
        %v337 = vld.sshfl [vmem:[#allocation1] sm:$0xff pattern:$0x75316420]
        %v338 = vld.sshfl [vmem:[#allocation1 + $0x8] sm:$0xff pattern:$0x75316420]
        %v339 = vld.sshfl [vmem:[#allocation1 + $0x10] sm:$0xff pattern:$0x75316420]
        %340 = vrot.lane.b32.xlu0 %v337, 110
        %v341 = vpop.permute.xlu0 %340
        %342 = vrot.lane.b32.xlu0 %v338, 110
        %v343 = vpop.permute.xlu0 %342
        %344 = vrot.lane.b32.xlu0 %v339, 110
        %v345 = vpop.permute.xlu0 %344
        %vm346 = vcmask 900096
        %v347 = vsel %vm346, %v341, %v343
        %v348 = vsel %vm346, %v343, %v345
        %352 = vst [vmem:[#allocation1] ss:$2 sm:$0xff] %v283
        %s353 = scalar_lea.vmem [#allocation1], 16
        %354 = vst [vmem:[%s353] ss:$2 sm:$0xff] %v284
        %v355 = vld.sshfl [vmem:[#allocation1] sm:$0xff pattern:$0x75316420]
        %v356 = vld.sshfl [vmem:[#allocation1 + $0x8] sm:$0xff pattern:$0x75316420]
        %v357 = vld.sshfl [vmem:[#allocation1 + $0x10] sm:$0xff pattern:$0x75316420]
        %358 = vrot.lane.b32.xlu0 %v355, 109
        %v359 = vpop.permute.xlu0 %358
        %360 = vrot.lane.b32.xlu0 %v356, 109
        %v361 = vpop.permute.xlu0 %360
        %362 = vrot.lane.b32.xlu0 %v357, 109
        %v363 = vpop.permute.xlu0 %362
        %vm364 = vcmask 891904
        %v365 = vsel %vm364, %v359, %v361
        %v366 = vsel %vm364, %v361, %v363
        %s370 = scalar_lea.vmem [#allocation1], 1
        %371 = vst [vmem:[%s370] ss:$2 sm:$0xff] %v283
        %s372 = scalar_lea.vmem [#allocation1], 17
        %373 = vst [vmem:[%s372] ss:$2 sm:$0xff] %v284
        %v374 = vld.sshfl [vmem:[#allocation1] sm:$0xff pattern:$0x75316420]
        %v375 = vld.sshfl [vmem:[#allocation1 + $0x8] sm:$0xff pattern:$0x75316420]
        %v376 = vld.sshfl [vmem:[#allocation1 + $0x10] sm:$0xff pattern:$0x75316420]
        %377 = vrot.lane.b32.xlu0 %v374, 108
        %v378 = vpop.permute.xlu0 %377
        %379 = vrot.lane.b32.xlu0 %v375, 108
        %v380 = vpop.permute.xlu0 %379
        %381 = vrot.lane.b32.xlu0 %v376, 108
        %v382 = vpop.permute.xlu0 %381
        %vm383 = vcmask 883712
        %v384 = vsel %vm383, %v378, %v380
        %v385 = vsel %vm383, %v380, %v382
        %389 = vst [vmem:[#allocation1] ss:$2 sm:$0xff] %v283
        %s390 = scalar_lea.vmem [#allocation1], 16
        %391 = vst [vmem:[%s390] ss:$2 sm:$0xff] %v284
        %v392 = vld.sshfl [vmem:[#allocation1] sm:$0xff pattern:$0x75316420]
        %v393 = vld.sshfl [vmem:[#allocation1 + $0x8] sm:$0xff pattern:$0x75316420]
        %v394 = vld.sshfl [vmem:[#allocation1 + $0x10] sm:$0xff pattern:$0x75316420]
        %395 = vrot.lane.b32.xlu0 %v392, 92
        %v396 = vpop.permute.xlu0 %395
        %397 = vrot.lane.b32.xlu0 %v393, 92
        %v398 = vpop.permute.xlu0 %397
        %399 = vrot.lane.b32.xlu0 %v394, 92
        %v400 = vpop.permute.xlu0 %399
        %vm401 = vcmask 752640
        %v402 = vsel %vm401, %v396, %v398
        %v403 = vsel %vm401, %v398, %v400
        %s407 = scalar_lea.vmem [#allocation1], 1
        %408 = vst [vmem:[%s407] ss:$2 sm:$0xff] %v283
        %s409 = scalar_lea.vmem [#allocation1], 17
        %410 = vst [vmem:[%s409] ss:$2 sm:$0xff] %v284
        %v411 = vld.sshfl [vmem:[#allocation1] sm:$0xff pattern:$0x75316420]
        %v412 = vld.sshfl [vmem:[#allocation1 + $0x8] sm:$0xff pattern:$0x75316420]
        %v413 = vld.sshfl [vmem:[#allocation1 + $0x10] sm:$0xff pattern:$0x75316420]
        %414 = vrot.lane.b32.xlu0 %v411, 91
        %v415 = vpop.permute.xlu0 %414
        %416 = vrot.lane.b32.xlu0 %v412, 91
        %v417 = vpop.permute.xlu0 %416
        %418 = vrot.lane.b32.xlu0 %v413, 91
        %v419 = vpop.permute.xlu0 %418
        %vm420 = vcmask 744448
        %v421 = vsel %vm420, %v415, %v417
        %v422 = vsel %vm420, %v417, %v419
        %426 = vst [vmem:[#allocation1] ss:$2 sm:$0xff] %v283
        %s427 = scalar_lea.vmem [#allocation1], 16
        %428 = vst [vmem:[%s427] ss:$2 sm:$0xff] %v284
        %v429 = vld.sshfl [vmem:[#allocation1] sm:$0xff pattern:$0x75316420]
        %v430 = vld.sshfl [vmem:[#allocation1 + $0x8] sm:$0xff pattern:$0x75316420]
        %v431 = vld.sshfl [vmem:[#allocation1 + $0x10] sm:$0xff pattern:$0x75316420]
        %432 = vrot.lane.b32.xlu0 %v429, 90
        %v433 = vpop.permute.xlu0 %432
        %434 = vrot.lane.b32.xlu0 %v430, 90
        %v435 = vpop.permute.xlu0 %434
        %436 = vrot.lane.b32.xlu0 %v431, 90
        %v437 = vpop.permute.xlu0 %436
        %vm438 = vcmask 736256
        %v439 = vsel %vm438, %v433, %v435
        %v440 = vsel %vm438, %v435, %v437
        %vm441 = vcmask 1043456
        %v442 = vsel %vm441, %v290, %v310
        %v443 = vsel %vm441, %v291, %v311
        %v444 = vsel %vm441, %v292, %v308
        %v445 = vsel %vm441, %v328, %v347
        %v446 = vsel %vm441, %v329, %v348
        %v447 = vsel %vm441, %v326, %v345
        %v448 = vsel %vm441, %v365, %v384
        %v449 = vsel %vm441, %v366, %v385
        %v450 = vsel %vm441, %v363, %v382
        %v451 = vsel %vm441, %v402, %v421
        %v452 = vsel %vm441, %v403, %v422
        %v453 = vsel %vm441, %v400, %v419
        %v454 = vld [vmem:[#allocation3] sm:$0xff]
        %v455 = vld [vmem:[#allocation3 + $0x8] sm:$0xff]
        %v456 = vld [vmem:[%s2] sm:$0xff]
        %v457 = vld [vmem:[%s2 + $0x8] sm:$0xff]
        %459 = vset.pattern.permute.xlu0 0
        %460 = vperm.xlu0 %459, %v456
        %v461 = vpop.permute.xlu0 %460
        %464 = vset.pattern.permute.xlu0 0
        %465 = vperm.xlu0 %464, %v457
        %v466 = vpop.permute.xlu0 %465
        %vm468 = vcmask 293888
        %v470 = vsel %vm468, %v454, 0
        %v473 = vsel %vm468, %v455, 0
        %v475 = vsel %vm441, %v439, 0
        %v477 = vsel %vm441, %v440, 0
        %v479 = vsel %vm441, %v437, 0
        %481 = vmatpush.msra.mxu0 0.0
        %482 = vmatpush.msra.mxu0 0.0
        %483 = vmatpush.msra.mxu0 0.0
        %484 = vmatpush.msra.mxu0 0.0
        %485 = vmatpush.msra.mxu0 0.0
        %486 = vmatpush.msra.mxu0 0.0
        %487 = vmatpush.msra.mxu0 0.0
        %488 = vmatpush.msra.mxu0 0.0
        %489 = vmatpush.msra.mxu0 0.0
        %490 = vmatpush.msra.mxu0 0.0
        %491 = vmatpush.msra.mxu0 0.0
        %492 = vmatpush.msra.mxu0 %v475
        %493 = vmatpush.msra.mxu0 %v451
        %494 = vmatpush.msra.mxu0 %v448
        %495 = vmatpush.msra.mxu0 %v445
        %496 = vmatpush.msra.mxu0 %v442
        %497 = vmatmul.f32.gmra.mxu0 %v470
        %v498 = vpop.f32.mrf.mxu0
        %v499 = vadd.f32 %v461, %v498
        %500 = vmatmul.f32.gmra.mxu0 %v473
        %v501 = vpop.f32.mrf.mxu0
        %v502 = vadd.f32 %v466, %v501
        %503 = vdwg.mxu0
        %504 = vmatpush.msra.mxu0 0.0
        %505 = vmatpush.msra.mxu0 0.0
        %506 = vmatpush.msra.mxu0 0.0
        %507 = vmatpush.msra.mxu0 0.0
        %508 = vmatpush.msra.mxu0 0.0
        %509 = vmatpush.msra.mxu0 0.0
        %510 = vmatpush.msra.mxu0 0.0
        %511 = vmatpush.msra.mxu0 0.0
        %512 = vmatpush.msra.mxu0 0.0
        %513 = vmatpush.msra.mxu0 0.0
        %514 = vmatpush.msra.mxu0 0.0
        %515 = vmatpush.msra.mxu0 %v477
        %516 = vmatpush.msra.mxu0 %v452
        %517 = vmatpush.msra.mxu0 %v449
        %518 = vmatpush.msra.mxu0 %v446
        %519 = vmatpush.msra.mxu0 %v443
        %520 = vmatmul.f32.gmra.mxu0 %v470
        %v521 = vpop.f32.mrf.mxu0
        %v522 = vadd.f32 %v461, %v521
        %523 = vmatmul.f32.gmra.mxu0 %v473
        %v524 = vpop.f32.mrf.mxu0
        %v525 = vadd.f32 %v466, %v524
        %526 = vdwg.mxu0
        %527 = vmatpush.msra.mxu0 0.0
        %528 = vmatpush.msra.mxu0 0.0
        %529 = vmatpush.msra.mxu0 0.0
        %530 = vmatpush.msra.mxu0 0.0
        %531 = vmatpush.msra.mxu0 0.0
        %532 = vmatpush.msra.mxu0 0.0
        %533 = vmatpush.msra.mxu0 0.0
        %534 = vmatpush.msra.mxu0 0.0
        %535 = vmatpush.msra.mxu0 0.0
        %536 = vmatpush.msra.mxu0 0.0
        %537 = vmatpush.msra.mxu0 0.0
        %538 = vmatpush.msra.mxu0 %v479
        %539 = vmatpush.msra.mxu0 %v453
        %540 = vmatpush.msra.mxu0 %v450
        %541 = vmatpush.msra.mxu0 %v447
        %542 = vmatpush.msra.mxu0 %v444
        %543 = vmatmul.f32.gmra.mxu0 %v470
        %v544 = vpop.f32.mrf.mxu0
        %v545 = vadd.f32 %v461, %v544
        %546 = vmatmul.f32.gmra.mxu0 %v473
        %v547 = vpop.f32.mrf.mxu0
        %v548 = vadd.f32 %v466, %v547
        %549 = vdwg.mxu0
        %v550 = vmax.f32 %v499, 0.0
        %v551 = vmax.f32 %v522, 0.0
        %v552 = vmax.f32 %v545, 0.0
        %v554 = vperm.slane %v282, 0
        %v555 = vperm.slane %v282, 1
        %v556 = vperm.slane %v282, 2
        %v560 = vmul.f32 %v550, %v554
        %v561 = vmul.f32 %v551, %v555
        %v562 = vmul.f32 %v552, %v556
        %566 = vrot.lane.b32.xlu0 %v560, 19
        %v567 = vpop.permute.xlu0 %566
        %568 = vrot.lane.b32.xlu0 %v561, 19
        %v569 = vpop.permute.xlu0 %568
        %570 = vrot.lane.b32.xlu0 %v562, 19
        %v571 = vpop.permute.xlu0 %570
        %vm572 = vcmask 154624
        %v573 = vsel %vm572, %v567, %v569
        %v574 = vsel %vm572, %v569, %v571
        %vm578 = vcmask 1047704
        %579 = vst.msk [vmem:[#allocation2] sm:$0xff] %vm578, %v567
        %580 = vst [vmem:[#allocation2 + $0x8] sm:$0xff] %v573
        %vm581 = vcmask 416768
        %582 = vst.msk [vmem:[#allocation2 + $0x10] sm:$0xff] %vm581, %v574
        %583 = vst.msk [vmem:[#allocation2] sm:$0xff] %vm572, 0.0
        %vm584 = vcmask 572824
        %585 = vst.msk [vmem:[#allocation2 + $0x10] sm:$0xff] %vm584, 0.0
        %v586 = vld [vmem:[#allocation2] sm:$0xff]
        %v587 = vld [vmem:[#allocation2 + $0x8] sm:$0xff]
        %v588 = vld [vmem:[#allocation2 + $0x10] sm:$0xff]
        %592 = vrot.lane.b32.xlu0 %v586, 127
        %v593 = vpop.permute.xlu0 %592
        %594 = vrot.lane.b32.xlu0 %v587, 127
        %v595 = vpop.permute.xlu0 %594
        %596 = vrot.lane.b32.xlu0 %v588, 127
        %v597 = vpop.permute.xlu0 %596
        %v598 = vsel %vm309, %v593, %v595
        %v599 = vsel %vm309, %v595, %v597
        %603 = vrot.lane.b32.xlu0 %v586, 126
        %v604 = vpop.permute.xlu0 %603
        %605 = vrot.lane.b32.xlu0 %v587, 126
        %v606 = vpop.permute.xlu0 %605
        %607 = vrot.lane.b32.xlu0 %v588, 126
        %v608 = vpop.permute.xlu0 %607
        %v609 = vsel %vm327, %v604, %v606
        %v610 = vsel %vm327, %v606, %v608
        %614 = vrot.lane.b32.xlu0 %v586, 110
        %v615 = vpop.permute.xlu0 %614
        %616 = vrot.lane.b32.xlu0 %v587, 110
        %v617 = vpop.permute.xlu0 %616
        %618 = vrot.lane.b32.xlu0 %v588, 110
        %v619 = vpop.permute.xlu0 %618
        %v620 = vsel %vm346, %v615, %v617
        %v621 = vsel %vm346, %v617, %v619
        %625 = vrot.lane.b32.xlu0 %v586, 109
        %v626 = vpop.permute.xlu0 %625
        %627 = vrot.lane.b32.xlu0 %v587, 109
        %v628 = vpop.permute.xlu0 %627
        %629 = vrot.lane.b32.xlu0 %v588, 109
        %v630 = vpop.permute.xlu0 %629
        %v631 = vsel %vm364, %v626, %v628
        %v632 = vsel %vm364, %v628, %v630
        %636 = vrot.lane.b32.xlu0 %v586, 108
        %v637 = vpop.permute.xlu0 %636
        %638 = vrot.lane.b32.xlu0 %v587, 108
        %v639 = vpop.permute.xlu0 %638
        %640 = vrot.lane.b32.xlu0 %v588, 108
        %v641 = vpop.permute.xlu0 %640
        %v642 = vsel %vm383, %v637, %v639
        %v643 = vsel %vm383, %v639, %v641
        %647 = vrot.lane.b32.xlu0 %v586, 92
        %v648 = vpop.permute.xlu0 %647
        %649 = vrot.lane.b32.xlu0 %v587, 92
        %v650 = vpop.permute.xlu0 %649
        %651 = vrot.lane.b32.xlu0 %v588, 92
        %v652 = vpop.permute.xlu0 %651
        %v653 = vsel %vm401, %v648, %v650
        %v654 = vsel %vm401, %v650, %v652
        %658 = vrot.lane.b32.xlu0 %v586, 91
        %v659 = vpop.permute.xlu0 %658
        %660 = vrot.lane.b32.xlu0 %v587, 91
        %v661 = vpop.permute.xlu0 %660
        %662 = vrot.lane.b32.xlu0 %v588, 91
        %v663 = vpop.permute.xlu0 %662
        %v664 = vsel %vm420, %v659, %v661
        %v665 = vsel %vm420, %v661, %v663
        %669 = vrot.lane.b32.xlu0 %v586, 90
        %v670 = vpop.permute.xlu0 %669
        %671 = vrot.lane.b32.xlu0 %v587, 90
        %v672 = vpop.permute.xlu0 %671
        %673 = vrot.lane.b32.xlu0 %v588, 90
        %v674 = vpop.permute.xlu0 %673
        %v675 = vsel %vm438, %v670, %v672
        %v676 = vsel %vm438, %v672, %v674
        %v680 = vld [vmem:[#allocation6] sm:$0xff]
        %v681 = vld [vmem:[%s4] sm:$0xff]
        %683 = vset.pattern.permute.xlu0 0
        %684 = vperm.xlu0 %683, %v681
        %v685 = vpop.permute.xlu0 %684
        %vm687 = vcmask 588800
        %v689 = vsel %vm687, %v680, 0
        %691 = vmatpush.msra.mxu0 0.0
        %692 = vmatpush.msra.mxu0 0.0
        %693 = vmatpush.msra.mxu0 0.0
        %694 = vmatpush.msra.mxu0 0.0
        %695 = vmatpush.msra.mxu0 0.0
        %696 = vmatpush.msra.mxu0 0.0
        %697 = vmatpush.msra.mxu0 0.0
        %698 = vmatpush.msra.mxu0 %v675
        %699 = vmatpush.msra.mxu0 %v664
        %700 = vmatpush.msra.mxu0 %v653
        %701 = vmatpush.msra.mxu0 %v642
        %702 = vmatpush.msra.mxu0 %v631
        %703 = vmatpush.msra.mxu0 %v620
        %704 = vmatpush.msra.mxu0 %v609
        %705 = vmatpush.msra.mxu0 %v598
        %706 = vmatpush.msra.mxu0 %v586
        %707 = vmatmul.f32.gmra.mxu0 %v689
        %v708 = vpop.f32.mrf.mxu0
        %v709 = vadd.f32 %v685, %v708
        %710 = vdwg.mxu0
        %711 = vmatpush.msra.mxu0 0.0
        %712 = vmatpush.msra.mxu0 0.0
        %713 = vmatpush.msra.mxu0 0.0
        %714 = vmatpush.msra.mxu0 0.0
        %715 = vmatpush.msra.mxu0 0.0
        %716 = vmatpush.msra.mxu0 0.0
        %717 = vmatpush.msra.mxu0 0.0
        %718 = vmatpush.msra.mxu0 %v676
        %719 = vmatpush.msra.mxu0 %v665
        %720 = vmatpush.msra.mxu0 %v654
        %721 = vmatpush.msra.mxu0 %v643
        %722 = vmatpush.msra.mxu0 %v632
        %723 = vmatpush.msra.mxu0 %v621
        %724 = vmatpush.msra.mxu0 %v610
        %725 = vmatpush.msra.mxu0 %v599
        %726 = vmatpush.msra.mxu0 %v587
        %727 = vmatmul.f32.gmra.mxu0 %v689
        %v728 = vpop.f32.mrf.mxu0
        %v729 = vadd.f32 %v685, %v728
        %730 = vdwg.mxu0
        %731 = vmatpush.msra.mxu0 0.0
        %732 = vmatpush.msra.mxu0 0.0
        %733 = vmatpush.msra.mxu0 0.0
        %734 = vmatpush.msra.mxu0 0.0
        %735 = vmatpush.msra.mxu0 0.0
        %736 = vmatpush.msra.mxu0 0.0
        %737 = vmatpush.msra.mxu0 0.0
        %738 = vmatpush.msra.mxu0 %v674
        %739 = vmatpush.msra.mxu0 %v663
        %740 = vmatpush.msra.mxu0 %v652
        %741 = vmatpush.msra.mxu0 %v641
        %742 = vmatpush.msra.mxu0 %v630
        %743 = vmatpush.msra.mxu0 %v619
        %744 = vmatpush.msra.mxu0 %v608
        %745 = vmatpush.msra.mxu0 %v597
        %746 = vmatpush.msra.mxu0 %v588
        %747 = vmatmul.f32.gmra.mxu0 %v689
        %v748 = vpop.f32.mrf.mxu0
        %v749 = vadd.f32 %v685, %v748
        %750 = vdwg.mxu0
        %v751 = vadd.f32 %v709, %v502
        %v752 = vadd.f32 %v729, %v525
        %v753 = vadd.f32 %v749, %v548
        %v754 = vmax.f32 %v751, 0.0
        %v755 = vmax.f32 %v752, 0.0
        %v756 = vmax.f32 %v753, 0.0
        %757 = vst [vmem:[%s276] sm:$0xff] %v754
        %758 = vst [vmem:[%s276 + $0x8] sm:$0xff] %v755
        %vm759 = vcmask 261120
        %760 = vst.msk [vmem:[%s276 + $0x10] sm:$0xff] %vm759, %v756
        %s761 = sand.u32 %s161, 1
        %s762 = scalar_lea.sflag [#allocation5], %s761
        %s763 = sand.u32 %s161, 1
        %s764 = smul.addr %s763, 24
        %s765 = scalar_lea.vmem [#allocation8], %s764
        // Predicated region
        $region53: #{tpu_custom_call.1} parent=43 // pred_check
          %p766 = pneg %p171
        $region54: #{tpu_custom_call.1} parent=43 // pred_check_branch
          %768 = sbr.rel (%p766) target = $region56
        $region55: #{tpu_custom_call.1} parent=43 // pred_region
          %770 = vsyncadd %s762, 0
          %s771 = smul.addr %s22, 3
          %s772 = smul.addr %s771, 8
          %s773 = scalar_lea.hbm %s6, %s772
          %s775 = sshll.u32 %s765, 4
          %s776 = int_to_ptr.vmem [resolvable:$true] %s775
          %s777 = sshll.u32 %s773, 4
          %s778 = int_to_ptr.hbm [resolvable:$true] %s777
          %780 = dma.vmem_to_hbm [thread:$0]  %s776, 384, %s778, %s762
        $region56: #{tpu_custom_call.1} parent=43 // pred_fallthru
          _
      $region44: #{tpu_custom_call.1} parent=5 // pred_fallthru
        _
      %p781 = scmp.le.s32.totalorder 2, %s17
      // Predicated region
      $region57: #{tpu_custom_call.1} parent=5 // pred_check
        %p782 = pneg %p781
      $region58: #{tpu_custom_call.1} parent=5 // pred_check_branch
        %784 = sbr.rel (%p782) target = $region60
      $region59: #{tpu_custom_call.1} parent=5 // pred_region
        %s785 = ssub.s32 %s17, 2
        // Predicated region
        $region61: #{tpu_custom_call.1} parent=59 // pred_check
          %p786 = pneg %p177
        $region62: #{tpu_custom_call.1} parent=59 // pred_check_branch
          %788 = sbr.rel (%p786) target = $region64
        $region63: #{tpu_custom_call.1} parent=59 // pred_region
          %s789 = sand.u32 %s162, 1
          %s790 = scalar_lea.sflag [#allocation5], %s789
          %s791 = sand.u32 %s162, 1
          %s792 = smul.addr %s791, 24
          %s793 = scalar_lea.vmem [#allocation8], %s792
          %795 = dma.done %s790, 384
        $region64: #{tpu_custom_call.1} parent=59 // pred_fallthru
          _
      $region60: #{tpu_custom_call.1} parent=5 // pred_fallthru
        _
    $region6: #{tpu_custom_call.1} parent=1 // loop_footer
      %s21 = sadd.s32 1, %s17
    $region7: #{tpu_custom_call.1} parent=1 // loop_footer_branch
      %16 = sbr.rel target = $region3
    $region8: #{tpu_custom_call.1} parent=1 // loop_exit
      _
    %796 = vsyncpa [#allocation4], 1
    %s797 = scalar_lea.sflag [#allocation4], 1
    %798 = vsyncpa %s797, 1
    %799 = vsyncpa [#allocation7], 1
    %800 = vsyncpa [#allocation5], 1
    %s801 = scalar_lea.sflag [#allocation5], 1
    %802 = vsyncpa %s801, 1

</llo_original>
